<compile_context>
chip_gen: v6e
topology: v6e:2x2x1
jax: 0.10.0
libtpu: 0.0.40
codegen_flags: <defaults>
</compile_context>

<pallas_src>
import jax
import jax.numpy as jnp
from jax.experimental import pallas as pl
from jax.experimental.pallas import tpu as pltpu


def identity_op(x, *args, **kwargs):
    """Faithful IdentityOp.forward: return the input unchanged.

    This is the fastest correct identity (no kernel launch, no HBM traffic).
    """
    return x


def _dma_copy_kernel(x_hbm_ref, o_hbm_ref, sem):
    # Single whole-array HBM->HBM DMA: no TensorCore vld/vst pipeline, no
    # VMEM sizing concerns, bit-exact byte copy at full HBM bandwidth.
    cp = pltpu.make_async_copy(x_hbm_ref, o_hbm_ref, sem)
    cp.start()
    cp.wait()


def identity_copy_pallas(x: jax.Array) -> jax.Array:
    """Materialized identity: bit-exact copy of x into a fresh buffer."""
    # Degenerate input: nothing to copy.
    if x.size == 0:
        return x

    orig_shape = x.shape
    # Avoid 0-d refs; any >=1-d shape is fine for a whole-array DMA.
    x_in = x.reshape(1, 1) if x.ndim == 0 else x

    itemsize = jnp.dtype(x.dtype).itemsize
    out = pl.pallas_call(
        _dma_copy_kernel,
        out_shape=jax.ShapeDtypeStruct(x_in.shape, x_in.dtype),
        in_specs=[pl.BlockSpec(memory_space=pl.ANY)],
        out_specs=pl.BlockSpec(memory_space=pl.ANY),
        scratch_shapes=[pltpu.SemaphoreType.DMA],
        cost_estimate=pl.CostEstimate(
            flops=0,
            transcendentals=0,
            bytes_accessed=2 * x.size * itemsize,
        ),
    )(x_in)

    return out.reshape(orig_shape)


if __name__ == "__main__":
    key = jax.random.PRNGKey(0)
    # Small shape consistent with a vision-encoder activation: (B, C, H, W).
    x = jax.random.normal(key, (2, 4, 16, 16), dtype=jnp.float32)

    # 1) Module-faithful forward: true no-op, zero bytes moved.
    y_noop = identity_op(x)
    assert y_noop is x

    # 2) Materialized copy path: exercises the Pallas HBM->HBM DMA kernel.
    y = identity_copy_pallas(x)
    jax.block_until_ready(y)
    assert y.shape == x.shape, (y.shape, x.shape)
    assert y.dtype == x.dtype, (y.dtype, x.dtype)
    assert bool(jnp.all(y == x)), "identity output mismatch"

    # 3) Layout-agnostic check: packed dtype with an odd trailing dim
    #    (previously the slow masked-store fallback; the DMA path doesn't care).
    x2 = jax.random.normal(jax.random.PRNGKey(1), (3, 5, 37), dtype=jnp.bfloat16)
    y2 = identity_copy_pallas(x2)
    jax.block_until_ready(y2)
    assert y2.shape == x2.shape and y2.dtype == x2.dtype
    assert bool(jnp.all(y2 == x2)), "identity output mismatch (bf16 odd shape)"

    print("KERNEL_OK")
</pallas_src>

<mosaic_0001>
module attributes {stable_mosaic.version = 11 : i64} {
  func.func @_dma_copy_kernel(%arg0: memref<2x4x16x16xf32, #tpu.memory_space<any>>, %arg1: memref<2x4x16x16xf32, #tpu.memory_space<any>>, %arg2: memref<!tpu.dma_semaphore, #tpu.memory_space<semaphore_mem>>) attributes {dimension_semantics = [], scalar_prefetch = 0 : i64, scratch_operands = 1 : i64, tpu.core_type = #tpu.core_type<tc>} {
    tpu.enqueue_dma source(%arg0 : memref<2x4x16x16xf32, #tpu.memory_space<any>>) target(%arg1 : memref<2x4x16x16xf32, #tpu.memory_space<any>>) target_semaphore(%arg2 : memref<!tpu.dma_semaphore, #tpu.memory_space<semaphore_mem>>)
    tpu.wait_dma2 semaphore(%arg2 : memref<!tpu.dma_semaphore, #tpu.memory_space<semaphore_mem>>) src(%arg0 : memref<2x4x16x16xf32, #tpu.memory_space<any>>) dst(%arg1 : memref<2x4x16x16xf32, #tpu.memory_space<any>>)
    return
  }
}

</mosaic_0001>

<llo_original>
// kernel: tpu_custom_call.1
$region0: #{tpu_custom_call.1}
  #allocation0 [shape = 'u32[]', space=smem, size = 0x4, offset = 0x4, fixed_abs, tag = 'smem constant byte address 0x4 - core index']
  #allocation1 [shape = 'u32[144,128]{1,0:T(1,128)}', space=vmem, size = 0x12000, scoped, tag = 'internal scratch']
  #allocation2 [shape = 's32[1]{0}', space=sflag, size = 0x4, scoped, tag = 'scratch operand']
  #allocation3 [shape = 's32[]', space=sflag, size = 0x4, offset = 0, fixed_abs, tag = 'sflag constant byte address 0x0 - dummy sync flag']
  #allocation4 [shape = 'u32[0]{0}', space=smem, size = 0, offset = 0, fixed_abs, tag = 'smem constant byte address 0x0 - null']
  %s0 = inlined_call_operand.hbm [shape: f32[2,4,16,16], index: 0, kind: input, shape index: {}]
  %s1 = inlined_call_operand.hbm [shape: f32[2,4,16,16], index: 1, kind: output, shape index: {}]
  %s2 = sld [smem:[#allocation0]]
  $region2: #{tpu_custom_call.1} parent=0
    _
  %s4 = ssub.s32 1, %s2
  %s5 = scalar_select 0, %s4, %s2
  %s7 = sshll.u32 1, 14
  %s8 = sxor.u32 4294967295, %s7
  %12 = dma.general %s0, 2048, %s1, [#allocation2], 131072, [#allocation4], 0, 0
  %s13 = smul.u32 2, 4
  %s14 = smul.u32 %s13, 16
  %s15 = smul.u32 %s14, 1
  %s16 = sshll.u32 %s15, 4
  %17 = dma.done [#allocation2], %s16
  %18 = vsyncmov [#allocation2]
  %s19 = vpop.sfrf %18
  %p20 = scmp.eq.s32.totalorder %s19, 0
  %p21 = pneg %p20
  %23 = shalt.err (%p21)

</llo_original>
